<compile_context>
chip_gen: v5e
topology: v5e:2x2
jax: 0.10.0
libtpu: 0.0.40
codegen_flags: <defaults>
</compile_context>

<pallas_src>
import functools

import jax
import jax.numpy as jnp
from jax.experimental import pallas as pl
from jax.experimental.pallas import tpu as pltpu


def _pool_sum_kernel(x_ref, sums_ref, acc_ref, *, rem):
    """Pass 1: accumulate per-row spatial sums over the hw (innermost) axis."""
    k = pl.program_id(1)
    nk = pl.num_programs(1)

    @pl.when(k == 0)
    def _():
        acc_ref[...] = jnp.zeros_like(acc_ref)

    if rem:
        # Only the final (partial) hw tile needs lane masking.
        @pl.when(k < nk - 1)
        def _():
            acc_ref[...] += jnp.sum(x_ref[...], axis=-1, keepdims=True,
                                    dtype=jnp.float32)

        @pl.when(k == nk - 1)
        def _():
            xt = x_ref[...]
            lane = jax.lax.broadcasted_iota(jnp.int32, xt.shape, 1)
            xt = jnp.where(lane < rem, xt, 0)
            acc_ref[...] += jnp.sum(xt, axis=-1, keepdims=True,
                                    dtype=jnp.float32)
    else:
        acc_ref[...] += jnp.sum(x_ref[...], axis=-1, keepdims=True,
                                dtype=jnp.float32)

    @pl.when(k == nk - 1)
    def _():
        sums_ref[...] = acc_ref[...]


def _broadcast_kernel(f_ref, feats_ref):
    """Pass 2: lane-dense broadcast (row_tile, 1) -> (row_tile, hw_tile)."""
    feats_ref[...] = jnp.broadcast_to(f_ref[...], feats_ref.shape)


def _vmem_limit_bytes():
    """Generation-aware scoped-VMEM limit (v7x: 64 MiB phys, v5e/v6e: 128)."""
    try:
        cap = int(pltpu.get_tpu_info().vmem_capacity_bytes)
    except Exception:
        cap = 64 << 20  # conservative (v7x) fallback if the query is unavailable
    return int(min(max(cap - (16 << 20), 32 << 20), 96 << 20))


def _pick_tiles(rows, hw, itemsize, target_tile_bytes=8 << 20, max_lane=4096):
    """Pick (row_tile, hw_tile).

    hw tile: full HW when small, else a multiple of 128 (lane-dense stores).
    row tile: full rows or a multiple of 8, sized so each grid step moves a
    multi-MiB slab (only one big tile per pass -> double-buffered ~2x this).
    """
    if hw <= 512:
        t_hw = hw
    else:
        t_hw = min(max_lane, (hw // 128) * 128)
    if rows < 8:
        r_t = rows
    else:
        want = max(8, target_tile_bytes // max(1, t_hw * itemsize))
        r_t = min(rows, (int(want) // 8) * 8)  # == rows (full) or multiple of 8
    return r_t, t_hw


@jax.jit
def channelwise_attention(x, w1, b1, w2, b2):
    """x: (N, C, H, W).  w1: (C, C//4), b1: (1, C//4), w2: (C//4, C),
    b2: (1, C)  -- linear weights stored transposed to (in, out)."""
    n, c, hh, ww = x.shape
    hw = hh * ww
    rows = n * c
    itemsize = x.dtype.itemsize
    x2 = x.reshape(rows, hw)

    r_t, t_hw = _pick_tiles(rows, hw, itemsize)
    n_row_tiles = pl.cdiv(rows, r_t)
    n_hw_tiles = pl.cdiv(hw, t_hw)
    rem = hw % t_hw  # valid lanes in the last (partial) hw tile, 0 if exact
    vmem_limit = _vmem_limit_bytes()

    # ------------- Pass 1: stream x once -> per-row f32 spatial sums ---------
    sums = pl.pallas_call(
        functools.partial(_pool_sum_kernel, rem=rem),
        out_shape=jax.ShapeDtypeStruct((rows, 1), jnp.float32),
        grid=(n_row_tiles, n_hw_tiles),
        in_specs=[pl.BlockSpec((r_t, t_hw), lambda i, k: (i, k))],
        out_specs=pl.BlockSpec((r_t, 1), lambda i, k: (i, 0)),
        scratch_shapes=[pltpu.VMEM((r_t, 1), jnp.float32)],
        compiler_params=pltpu.CompilerParams(
            dimension_semantics=("parallel", "arbitrary"),
            vmem_limit_bytes=vmem_limit),
        cost_estimate=pl.CostEstimate(
            flops=rows * hw, transcendentals=0,
            bytes_accessed=rows * hw * itemsize + rows * 4),
    )(x2)

    # ------------- Tiny MLP on (N, C): one batched matmul pair in JAX --------
    pooled = sums.reshape(n, c) * (1.0 / float(hw))
    h = jax.nn.relu(jnp.dot(pooled, w1, preferred_element_type=jnp.float32) + b1)
    f = jax.nn.sigmoid(jnp.dot(h, w2, preferred_element_type=jnp.float32) + b2)
    ca_act_reg = jnp.mean(f)

    # ------------- Pass 2: broadcast f to (N*C, HW), lane-dense stores -------
    f_col = f.astype(x.dtype).reshape(rows, 1)
    feats2 = pl.pallas_call(
        _broadcast_kernel,
        out_shape=jax.ShapeDtypeStruct((rows, hw), x.dtype),
        grid=(n_row_tiles, n_hw_tiles),
        in_specs=[pl.BlockSpec((r_t, 1), lambda i, k: (i, 0))],
        out_specs=pl.BlockSpec((r_t, t_hw), lambda i, k: (i, k)),
        compiler_params=pltpu.CompilerParams(
            dimension_semantics=("parallel", "parallel"),
            vmem_limit_bytes=vmem_limit),
        cost_estimate=pl.CostEstimate(
            flops=rows * hw, transcendentals=0,
            bytes_accessed=rows * itemsize + rows * hw * itemsize),
    )(f_col)

    return feats2.reshape(n, c, hh, ww), ca_act_reg


def _reference(x, w1, b1, w2, b2):
    pooled = jnp.mean(x, axis=(2, 3))
    hdn = jax.nn.relu(pooled @ w1 + b1)
    f = jax.nn.sigmoid(hdn @ w2 + b2)
    reg = jnp.mean(f)
    feats = jnp.broadcast_to(f[:, :, None, None], x.shape).astype(x.dtype)
    return feats, reg


if __name__ == "__main__":
    # Small deterministic shapes consistent with the module: in_channels=16.
    N, C, H, W = 2, 16, 16, 16
    C4 = C // 4

    key = jax.random.PRNGKey(0)
    kx, k1, k2, k3, k4 = jax.random.split(key, 5)

    x = jax.random.normal(kx, (N, C, H, W), dtype=jnp.float32)
    # nn.Linear(C, C//4) weight is (C//4, C); store transposed (in, out).
    w1 = jax.random.normal(k1, (C, C4), dtype=jnp.float32) * 0.1
    b1 = jax.random.normal(k2, (1, C4), dtype=jnp.float32) * 0.1
    # nn.Linear(C//4, C) weight is (C, C//4); store transposed (in, out).
    w2 = jax.random.normal(k3, (C4, C), dtype=jnp.float32) * 0.1
    b2 = jax.random.normal(k4, (1, C), dtype=jnp.float32) * 0.1

    feats, reg = channelwise_attention(x, w1, b1, w2, b2)
    jax.block_until_ready((feats, reg))

    feats_ref, reg_ref = _reference(x, w1, b1, w2, b2)
    assert feats.shape == (N, C, H, W)
    assert jnp.allclose(feats, feats_ref, atol=1e-5, rtol=1e-5)
    assert jnp.allclose(reg, reg_ref, atol=1e-5, rtol=1e-5)

    print("KERNEL_OK")
</pallas_src>

<mosaic_0001>
module attributes {stable_mosaic.version = 11 : i64} {
  func.func @_pool_sum_kernel(%arg0: i32, %arg1: i32, %arg2: memref<32x256xf32, #tpu.memory_space<vmem>>, %arg3: memref<32x1xf32, #tpu.memory_space<vmem>>, %arg4: memref<32x1xf32, #tpu.memory_space<vmem>>) attributes {dimension_semantics = [#tpu.dimension_semantics<parallel>, #tpu.dimension_semantics<arbitrary>], iteration_bounds = array<i64: 1, 1>, scalar_prefetch = 0 : i64, scratch_operands = 1 : i64, tpu.core_type = #tpu.core_type<tc>, window_params = [{transform_indices = @transform_0, window_bounds = array<i64: 32, 256>}, {transform_indices = @transform_1, window_bounds = array<i64: 32, 1>}]} {
    %c0_i32 = arith.constant 0 : i32
    %0 = arith.cmpi eq, %arg1, %c0_i32 : i32
    %1 = arith.extui %0 : i1 to i32
    %c0_i32_0 = arith.constant 0 : i32
    %2 = arith.cmpi ne, %1, %c0_i32_0 : i32
    scf.if %2 {
      %cst_8 = arith.constant 0.000000e+00 : f32
      %12 = vector.broadcast %cst_8 : f32 to vector<32x1xf32>
      %c0_9 = arith.constant 0 : index
      %c0_10 = arith.constant 0 : index
      %13 = vector.load %arg4[%c0_9, %c0_10] : memref<32x1xf32, #tpu.memory_space<vmem>>, vector<32x1xf32>
      tpu.vector_store %arg4[%c0_9, %c0_10], %12 {strides = array<i32>} : memref<32x1xf32, #tpu.memory_space<vmem>>, vector<32x1xf32>,
    } else {
    }
    %c0 = arith.constant 0 : index
    %c0_1 = arith.constant 0 : index
    %3 = vector.load %arg4[%c0, %c0_1] : memref<32x1xf32, #tpu.memory_space<vmem>>, vector<32x1xf32>
    %c0_2 = arith.constant 0 : index
    %c0_3 = arith.constant 0 : index
    %4 = vector.load %arg2[%c0_2, %c0_3] : memref<32x256xf32, #tpu.memory_space<vmem>>, vector<32x256xf32>
    %cst = arith.constant dense<0.000000e+00> : vector<32xf32>
    %5 = vector.multi_reduction <add>, %4, %cst [1] : vector<32x256xf32> to vector<32xf32>
    %6 = vector.shape_cast %5 : vector<32xf32> to vector<32x1xf32>
    %7 = arith.addf %3, %6 : vector<32x1xf32>
    %c0_4 = arith.constant 0 : index
    %c0_5 = arith.constant 0 : index
    %8 = vector.load %arg4[%c0_4, %c0_5] : memref<32x1xf32, #tpu.memory_space<vmem>>, vector<32x1xf32>
    tpu.vector_store %arg4[%c0_4, %c0_5], %7 {strides = array<i32>} : memref<32x1xf32, #tpu.memory_space<vmem>>, vector<32x1xf32>,
    %c0_i32_6 = arith.constant 0 : i32
    %9 = arith.cmpi eq, %arg1, %c0_i32_6 : i32
    %10 = arith.extui %9 : i1 to i32
    %c0_i32_7 = arith.constant 0 : i32
    %11 = arith.cmpi ne, %10, %c0_i32_7 : i32
    scf.if %11 {
      %c0_8 = arith.constant 0 : index
      %c0_9 = arith.constant 0 : index
      %12 = vector.load %arg4[%c0_8, %c0_9] : memref<32x1xf32, #tpu.memory_space<vmem>>, vector<32x1xf32>
      %c0_10 = arith.constant 0 : index
      %c0_11 = arith.constant 0 : index
      %13 = vector.load %arg3[%c0_10, %c0_11] : memref<32x1xf32, #tpu.memory_space<vmem>>, vector<32x1xf32>
      tpu.vector_store %arg3[%c0_10, %c0_11], %12 {strides = array<i32>} : memref<32x1xf32, #tpu.memory_space<vmem>>, vector<32x1xf32>,
    } else {
    }
    return
  }
  func.func @transform_0(%arg0: i32, %arg1: i32) -> (i32, i32) {
    %c0_i32 = arith.constant 0 : i32
    return %arg0, %arg1 : i32, i32
  }
  func.func @transform_1(%arg0: i32, %arg1: i32) -> (i32, i32) {
    %c0_i32 = arith.constant 0 : i32
    %c0_i32_0 = arith.constant 0 : i32
    return %arg0, %c0_i32 : i32, i32
  }
}

module attributes {stable_mosaic.version = 11 : i64} {
  func.func @_broadcast_kernel(%arg0: i32, %arg1: i32, %arg2: memref<32x1xf32, #tpu.memory_space<vmem>>, %arg3: memref<32x256xf32, #tpu.memory_space<vmem>>) attributes {dimension_semantics = [#tpu.dimension_semantics<parallel>, #tpu.dimension_semantics<parallel>], iteration_bounds = array<i64: 1, 1>, scalar_prefetch = 0 : i64, scratch_operands = 0 : i64, tpu.core_type = #tpu.core_type<tc>, window_params = [{transform_indices = @transform_0, window_bounds = array<i64: 32, 1>}, {transform_indices = @transform_1, window_bounds = array<i64: 32, 256>}]} {
    %c0 = arith.constant 0 : index
    %c0_0 = arith.constant 0 : index
    %0 = vector.load %arg2[%c0, %c0_0] : memref<32x1xf32, #tpu.memory_space<vmem>>, vector<32x1xf32>
    %1 = vector.shape_cast %0 : vector<32x1xf32> to vector<32x1xf32>
    %2 = vector.broadcast %1 : vector<32x1xf32> to vector<32x256xf32>
    %c0_1 = arith.constant 0 : index
    %c0_2 = arith.constant 0 : index
    %3 = vector.load %arg3[%c0_1, %c0_2] : memref<32x256xf32, #tpu.memory_space<vmem>>, vector<32x256xf32>
    tpu.vector_store %arg3[%c0_1, %c0_2], %2 {strides = array<i32>} : memref<32x256xf32, #tpu.memory_space<vmem>>, vector<32x256xf32>,
    return
  }
  func.func @transform_0(%arg0: i32, %arg1: i32) -> (i32, i32) {
    %c0_i32 = arith.constant 0 : i32
    %c0_i32_0 = arith.constant 0 : i32
    return %arg0, %c0_i32 : i32, i32
  }
  func.func @transform_1(%arg0: i32, %arg1: i32) -> (i32, i32) {
    %c0_i32 = arith.constant 0 : i32
    return %arg0, %arg1 : i32, i32
  }
}

</mosaic_0001>

<llo_original>
// kernel: channelwise_attention.2
$region0: #{channelwise_attention.2}
  #allocation0 [shape = 'u32[]', space=smem, size = 0x4, offset = 0x4, fixed_abs, tag = 'smem constant byte address 0x4 - core index']
  #allocation1 [shape = 'u32[72,128]{1,0:T(1,128)}', space=vmem, size = 0x9000, scoped, tag = 'internal scratch']
  #allocation2 [shape = 'f32[32,1]{1,0:T(8,128)}', space=vmem, size = 0x4000, scoped, tag = 'scratch operand']
  %s0 = inlined_call_operand.vmem [shape: f32[32,256], index: 0, kind: input, shape index: {}]
  %s1 = inlined_call_operand.vmem [shape: f32[32,1], index: 1, kind: output, shape index: {}]
  %s2 = sld [smem:[#allocation0]]
  $region22: #{channelwise_attention.2} parent=0
    _
  %s4 = ssub.s32 1, %s2
  %s5 = scalar_select 0, %s4, %s2
  // Predicated region
  $region2: #{channelwise_attention.2} parent=0 // pred_check
    _
  $region3: #{channelwise_attention.2} parent=0 // pred_check_branch
    %7 = sbr.rel (0) target = $region5
  $region4: #{channelwise_attention.2} parent=0 // pred_region
    _
  $region5: #{channelwise_attention.2} parent=0 // pred_fallthru
    _
  %p8 = scmp.eq.s32.totalorder 0, 0
  // Predicated region
  $region6: #{channelwise_attention.2} parent=0 // pred_check
    %p9 = pneg %p8
  $region7: #{channelwise_attention.2} parent=0 // pred_check_branch
    %11 = sbr.rel (%p9) target = $region9
  $region8: #{channelwise_attention.2} parent=0 // pred_region
    %vm12 = vcmask 7168
    %13 = vst.msk [vmem:[#allocation2] sm:$0xff] %vm12, 0.0
    %14 = vst.msk [vmem:[#allocation2 + $0x8] sm:$0xff] %vm12, 0.0
    %15 = vst.msk [vmem:[#allocation2 + $0x10] sm:$0xff] %vm12, 0.0
    %16 = vst.msk [vmem:[#allocation2 + $0x18] sm:$0xff] %vm12, 0.0
  $region9: #{channelwise_attention.2} parent=0 // pred_fallthru
    _
  %v17 = vld [vmem:[#allocation2] sm:$0xff]
  %v18 = vld [vmem:[#allocation2 + $0x8] sm:$0xff]
  %v19 = vld [vmem:[#allocation2 + $0x10] sm:$0xff]
  %v20 = vld [vmem:[#allocation2 + $0x18] sm:$0xff]
  %v21 = vld [vmem:[%s0] sm:$0xff]
  %v22 = vld [vmem:[%s0 + $0x8] sm:$0xff]
  %v23 = vld [vmem:[%s0 + $0x10] sm:$0xff]
  %v24 = vld [vmem:[%s0 + $0x18] sm:$0xff]
  %v25 = vld [vmem:[%s0 + $0x20] sm:$0xff]
  %v26 = vld [vmem:[%s0 + $0x28] sm:$0xff]
  %v27 = vld [vmem:[%s0 + $0x30] sm:$0xff]
  %v28 = vld [vmem:[%s0 + $0x38] sm:$0xff]
  %v29 = vadd.f32 %v21, %v22
  %30 = vadd.xlane.f32.xlu0 %v29
  %v31 = vpop.xlane.xlu0 %30
  %v32 = vadd.f32 %v23, %v24
  %33 = vadd.xlane.f32.xlu0 %v32
  %v34 = vpop.xlane.xlu0 %33
  %v35 = vadd.f32 %v25, %v26
  %36 = vadd.xlane.f32.xlu0 %v35
  %v37 = vpop.xlane.xlu0 %36
  %v38 = vadd.f32 %v27, %v28
  %39 = vadd.xlane.f32.xlu0 %v38
  %v40 = vpop.xlane.xlu0 %39
  %v41 = vadd.f32 %v17, %v31
  %v42 = vadd.f32 %v18, %v34
  %v43 = vadd.f32 %v19, %v37
  %v44 = vadd.f32 %v20, %v40
  %vm45 = vcmask 7168
  %46 = vst.msk [vmem:[#allocation2] sm:$0xff] %vm45, %v41
  %47 = vst.msk [vmem:[#allocation2 + $0x8] sm:$0xff] %vm45, %v42
  %48 = vst.msk [vmem:[#allocation2 + $0x10] sm:$0xff] %vm45, %v43
  %49 = vst.msk [vmem:[#allocation2 + $0x18] sm:$0xff] %vm45, %v44
  // Predicated region
  $region10: #{channelwise_attention.2} parent=0 // pred_check
    %p50 = pneg %p8
  $region11: #{channelwise_attention.2} parent=0 // pred_check_branch
    %52 = sbr.rel (%p50) target = $region13
  $region12: #{channelwise_attention.2} parent=0 // pred_region
    %v53 = vld [vmem:[#allocation2] sm:$0xff]
    %v54 = vld [vmem:[#allocation2 + $0x8] sm:$0xff]
    %v55 = vld [vmem:[#allocation2 + $0x10] sm:$0xff]
    %v56 = vld [vmem:[#allocation2 + $0x18] sm:$0xff]
    %57 = vst.msk [vmem:[%s1] sm:$0xff] %vm45, %v53
    %58 = vst.msk [vmem:[%s1 + $0x8] sm:$0xff] %vm45, %v54
    %59 = vst.msk [vmem:[%s1 + $0x10] sm:$0xff] %vm45, %v55
    %60 = vst.msk [vmem:[%s1 + $0x18] sm:$0xff] %vm45, %v56
  $region13: #{channelwise_attention.2} parent=0 // pred_fallthru
    _
  // Predicated region
  $region14: #{channelwise_attention.2} parent=0 // pred_check
    _
  $region15: #{channelwise_attention.2} parent=0 // pred_check_branch
    %62 = sbr.rel (0) target = $region17
  $region16: #{channelwise_attention.2} parent=0 // pred_region
    _
  $region17: #{channelwise_attention.2} parent=0 // pred_fallthru
    _
  // Predicated region
  $region18: #{channelwise_attention.2} parent=0 // pred_check
    _
  $region19: #{channelwise_attention.2} parent=0 // pred_check_branch
    %64 = sbr.rel (0) target = $region21
  $region20: #{channelwise_attention.2} parent=0 // pred_region
    _
  $region21: #{channelwise_attention.2} parent=0 // pred_fallthru
    _

// kernel: channelwise_attention.3
$region0: #{channelwise_attention.3}
  #allocation0 [shape = 'u32[]', space=smem, size = 0x4, offset = 0x4, fixed_abs, tag = 'smem constant byte address 0x4 - core index']
  #allocation1 [shape = 'u32[72,128]{1,0:T(1,128)}', space=vmem, size = 0x9000, scoped, tag = 'internal scratch']
  %s0 = inlined_call_operand.vmem [shape: f32[32,1], index: 0, kind: input, shape index: {}]
  %s1 = inlined_call_operand.vmem [shape: f32[32,256], index: 1, kind: output, shape index: {}]
  %s2 = sld [smem:[#allocation0]]
  $region14: #{channelwise_attention.3} parent=0
    _
  %s4 = ssub.s32 1, %s2
  %s5 = scalar_select 0, %s4, %s2
  // Predicated region
  $region2: #{channelwise_attention.3} parent=0 // pred_check
    _
  $region3: #{channelwise_attention.3} parent=0 // pred_check_branch
    %7 = sbr.rel (0) target = $region5
  $region4: #{channelwise_attention.3} parent=0 // pred_region
    _
  $region5: #{channelwise_attention.3} parent=0 // pred_fallthru
    _
  %v8 = vld [vmem:[%s0] sm:$0xff]
  %v9 = vld [vmem:[%s0 + $0x8] sm:$0xff]
  %v10 = vld [vmem:[%s0 + $0x10] sm:$0xff]
  %v11 = vld [vmem:[%s0 + $0x18] sm:$0xff]
  %13 = vset.pattern.permute.xlu0 0
  %14 = vperm.xlu0 %13, %v8
  %v15 = vpop.permute.xlu0 %14
  %18 = vset.pattern.permute.xlu0 0
  %19 = vperm.xlu0 %18, %v9
  %v20 = vpop.permute.xlu0 %19
  %23 = vset.pattern.permute.xlu0 0
  %24 = vperm.xlu0 %23, %v10
  %v25 = vpop.permute.xlu0 %24
  %28 = vset.pattern.permute.xlu0 0
  %29 = vperm.xlu0 %28, %v11
  %v30 = vpop.permute.xlu0 %29
  %32 = vst [vmem:[%s1] sm:$0xff] %v15
  %33 = vst [vmem:[%s1 + $0x8] sm:$0xff] %v15
  %34 = vst [vmem:[%s1 + $0x10] sm:$0xff] %v20
  %35 = vst [vmem:[%s1 + $0x18] sm:$0xff] %v20
  %36 = vst [vmem:[%s1 + $0x20] sm:$0xff] %v25
  %37 = vst [vmem:[%s1 + $0x28] sm:$0xff] %v25
  %38 = vst [vmem:[%s1 + $0x30] sm:$0xff] %v30
  %39 = vst [vmem:[%s1 + $0x38] sm:$0xff] %v30
  // Predicated region
  $region6: #{channelwise_attention.3} parent=0 // pred_check
    _
  $region7: #{channelwise_attention.3} parent=0 // pred_check_branch
    %41 = sbr.rel (0) target = $region9
  $region8: #{channelwise_attention.3} parent=0 // pred_region
    _
  $region9: #{channelwise_attention.3} parent=0 // pred_fallthru
    _
  // Predicated region
  $region10: #{channelwise_attention.3} parent=0 // pred_check
    _
  $region11: #{channelwise_attention.3} parent=0 // pred_check_branch
    %43 = sbr.rel (0) target = $region13
  $region12: #{channelwise_attention.3} parent=0 // pred_region
    _
  $region13: #{channelwise_attention.3} parent=0 // pred_fallthru
    _

</llo_original>
